<compile_context>
chip_gen: v7x
topology: tpu7x:2x2x1
jax: 0.10.0
libtpu: 0.0.40
codegen_flags: <defaults>
</compile_context>

<pallas_src>
import jax
import jax.numpy as jnp
from jax import lax
from jax.experimental import pallas as pl
from jax.experimental.pallas import tpu as pltpu

HIGHEST = lax.Precision.HIGHEST


# --------------------------- generation-aware sizing ------------------------
def _vmem_capacity_bytes():
    try:
        info = pltpu.get_tpu_info()
        for attr in ("vmem_capacity_bytes", "vmem_capacity", "vmem_bytes"):
            v = getattr(info, attr, None)
            if v:
                return int(v)
    except Exception:
        pass
    return 64 << 20            # conservative (v7x-sized) fallback


def _vmem_limit_bytes():
    cap = _vmem_capacity_bytes()
    # v5e/v6e have 128 MiB physical VMEM (default scoped limit leaves most of
    # it on the table); v7x has 64 MiB per TensorCore.
    return (104 << 20) if cap >= (96 << 20) else (52 << 20)


def _slab_budget_bytes():
    cap = _vmem_capacity_bytes()
    return (20 << 20) if cap >= (96 << 20) else (10 << 20)


def _use_bf16_exp():
    """bf16 EUP/VALU only exist on v6e / v7x; keep exp in f32 on older gens."""
    try:
        kind = jax.devices()[0].device_kind.lower()
    except Exception:
        return False
    return not any(g in kind for g in ("v2", "v3", "v4", "v5"))


def _pick_tile_n(n, slab_budget_bytes=None):
    """Largest 128-multiple row-tile TN dividing n whose live slab fits budget.

    Live slab memory per row is ~10*n bytes (slab f32 + exp f32 + exp bf16).
    """
    if slab_budget_bytes is None:
        slab_budget_bytes = _slab_budget_bytes()
    max_rows = slab_budget_bytes // (10 * n)
    for cand in (1024, 512, 256, 128):
        if cand <= max_rows and n % cand == 0:
            return cand
    # N is asserted to be a multiple of 128, so 128 always divides it; for very
    # large N even TN=128 may exceed the budget.
    # TODO(synk): flash-style column tiling (online max/sum over an m-axis tile)
    # to decouple live VMEM from N for N >= ~64K volumes.
    return 128


# ---------------------------------------------------------------------------
# Pallas kernel: one (batch, row-tile) step of the spatial affinity attention
# ---------------------------------------------------------------------------
def _make_kernel(c8, n, tile_n, use_bf16_exp):
    def kernel(qk_ref,            # VMEM (1, 2*C8, N) bf16  rows = [S@k ; q]
               pv_ref,            # VMEM (1, C, N)    bf16  gamma_s*(W_v x + b_v)
               base_ref,          # VMEM (1, C, N)    f32   gamma_c*w_ch + 3*x
               o_ref):            # VMEM (1, C, N)    f32   resident across t
        t = pl.program_id(1)

        # ---- per-batch init: seed the accumulator with the hoisted base ----
        @pl.when(t == 0)
        def _init():
            o_ref[0] = base_ref[0]

        # ---- one (TN, N) row-slab of the affinity (never materialized) -----
        col0 = pl.multiple_of(t * tile_n, tile_n)
        ksk = qk_ref[0, :c8, :]                                  # (C8, N)  bf16
        q_tile = qk_ref[0, c8:, pl.ds(col0, tile_n)]             # (C8, TN) bf16
        # aff[r, m] = sum_a q[a, col0+r] * (S @ k)[a, m]  (exact regroup)
        slab = lax.dot_general(q_tile, ksk, (((0,), (0,)), ((), ())),
                               preferred_element_type=jnp.float32)  # (TN, N)
        m = jnp.max(slab, axis=-1, keepdims=True)                   # (TN, 1)
        z = slab - m
        if use_bf16_exp:
            e = jnp.exp(z.astype(jnp.bfloat16))                     # (TN, N) bf16
        else:
            e = jnp.exp(z).astype(jnp.bfloat16)

        # Row-sum on the MXU: ones(1,N) contracted with e over N gives the
        # softmax denominators already lane-oriented as (1, TN) — exactly the
        # layout needed to scale pv_tile's columns (no (TN,N) normalize pass).
        ones_row = jnp.ones((1, n), dtype=jnp.bfloat16)
        l_row = lax.dot_general(ones_row, e, (((1,), (1,)), ((), ())),
                                preferred_element_type=jnp.float32)  # (1, TN)
        recip = pl.reciprocal(l_row, approx=True)                    # (1, TN)

        pv_tile = pv_ref[0, :, pl.ds(col0, tile_n)]                  # (C, TN) bf16
        pv_scaled = (pv_tile.astype(jnp.float32) * recip).astype(jnp.bfloat16)
        # weights[:, m] += sum_r pv_scaled[:, r] * e[r, m]
        o_ref[0] += jnp.dot(pv_scaled, e, preferred_element_type=jnp.float32)

    return kernel


def _affinity_attention_core(qk, pv, base, tile_n):
    B, two_c8, N = qk.shape
    c8 = two_c8 // 2
    C = pv.shape[1]
    assert N % tile_n == 0, "tile_n must divide N"
    assert tile_n % 128 == 0, "tile_n must be a multiple of 128 (lane-dense)"
    T = N // tile_n
    kernel = _make_kernel(c8, N, tile_n, _use_bf16_exp())
    return pl.pallas_call(
        kernel,
        out_shape=jax.ShapeDtypeStruct((B, C, N), jnp.float32),
        grid=(B, T),
        in_specs=[
            pl.BlockSpec((1, two_c8, N), lambda b, t: (b, 0, 0)),   # [S@k ; q] bf16
            pl.BlockSpec((1, C, N), lambda b, t: (b, 0, 0)),        # pv bf16
            pl.BlockSpec((1, C, N), lambda b, t: (b, 0, 0)),        # base f32
        ],
        out_specs=pl.BlockSpec((1, C, N), lambda b, t: (b, 0, 0)),
        compiler_params=pltpu.CompilerParams(
            dimension_semantics=("parallel", "arbitrary"),
            vmem_limit_bytes=_vmem_limit_bytes()),
    )(qk, pv, base)


# ---------------------------------------------------------------------------
# JAX glue: directional 3-tap convs, regroup einsums, hoisted per-batch terms
# ---------------------------------------------------------------------------
def conv3d_nc(x, w, b, padding):
    dn = lax.conv_dimension_numbers(x.shape, w.shape, ("NCHWD", "OIHWD", "NCHWD"))
    y = lax.conv_general_dilated(x, w, window_strides=(1, 1, 1), padding=padding,
                                 dimension_numbers=dn, precision=HIGHEST)
    return y + b.reshape(1, -1, 1, 1, 1)


def affinity_attention_3d(params, x, *, tile_n=None):
    B, C, H, W, D = x.shape
    N = H * W * D
    assert N % 128 == 0, "H*W*D must be a multiple of 128"
    # TODO(synk): for arbitrary volumes, pad N to a multiple of 128 and mask the
    # padded softmax columns (-inf logits) / padded pv columns (0) in-kernel.
    q = conv3d_nc(x, params["wq"], params["bq"], ((0, 0), (1, 1), (0, 0))).reshape(B, -1, N)
    k = conv3d_nc(x, params["wk"], params["bk"], ((1, 1), (0, 0), (0, 0))).reshape(B, -1, N)
    j = conv3d_nc(x, params["wj"], params["bj"], ((0, 0), (0, 0), (1, 1))).reshape(B, -1, N)
    xf = x.reshape(B, C, N)

    # associativity regroup: aff = q^T (k j^T) k ; only the tiny pieces live here
    s = jnp.einsum("ban,bcn->bac", k, j, precision=HIGHEST)        # (B, C8, C8)
    ksk = jnp.einsum("bac,bcn->ban", s, k, precision=HIGHEST)      # (B, C8, N)
    # pack bf16 MXU operands: full-width S@k at aligned offset 0, q after it
    qk = jnp.concatenate([ksk, q], axis=1).astype(jnp.bfloat16)    # (B, 2*C8, N)

    gamma_s = params["gamma_sab"]
    gamma_c = params["gamma_cab"]

    # hoisted: value 1x1x1 conv with gamma_sab folded (bf16 MXU operand)
    pv = jnp.einsum("oc,bcn->bon", params["wv"], xf, precision=HIGHEST) \
        + params["bv"].reshape(1, -1, 1)
    pv = (gamma_s * pv).astype(jnp.bfloat16)                       # (B, C, N)

    # hoisted: channel attention block (tiny C x C work) + residual base
    ca1 = jnp.einsum("bcn,bdn->bcd", xf, xf, precision=HIGHEST)    # x x^T
    ca = jnp.einsum("bcd,bde->bce", ca1, ca1, precision=HIGHEST)
    ca_new = jnp.max(ca, axis=-1, keepdims=True) - ca
    ca_sm = jax.nn.softmax(ca_new, axis=-1)
    w_ch = jnp.einsum("bcd,bdn->bcn", ca_sm, xf, precision=HIGHEST)
    base = (gamma_c * w_ch + 3.0 * xf).astype(jnp.float32)         # (B, C, N)

    tn = tile_n if tile_n is not None else _pick_tile_n(N)
    out = _affinity_attention_core(qk, pv, base, tn)
    return out.reshape(B, C, H, W, D)


# ---------------------------------------------------------------------------
# Pure-JAX reference (verbatim PyTorch forward, naive matmul order, f32 HIGHEST)
# ---------------------------------------------------------------------------
def reference_forward(params, x):
    B, C, H, W, D = x.shape
    N = H * W * D
    q = conv3d_nc(x, params["wq"], params["bq"], ((0, 0), (1, 1), (0, 0))).reshape(B, -1, N)
    k = conv3d_nc(x, params["wk"], params["bk"], ((1, 1), (0, 0), (0, 0))).reshape(B, -1, N)
    j = conv3d_nc(x, params["wj"], params["bj"], ((0, 0), (0, 0), (1, 1))).reshape(B, -1, N)
    xf = x.reshape(B, C, N)
    # spatial attention block
    aff1 = jnp.einsum("bcn,bcm->bnm", q, k, precision=HIGHEST)
    aff2 = jnp.einsum("bcn,bcm->bnm", j, k, precision=HIGHEST)
    aff = jnp.einsum("bnm,bmk->bnk", aff1, aff2, precision=HIGHEST)
    aff = jax.nn.softmax(aff, axis=-1)
    pv = jnp.einsum("oc,bcn->bon", params["wv"], xf, precision=HIGHEST) \
        + params["bv"].reshape(1, -1, 1)
    w_s = jnp.einsum("bcn,bnm->bcm", pv, aff, precision=HIGHEST)
    sab = params["gamma_sab"] * w_s + xf
    # channel attention block
    ca1 = jnp.einsum("bcn,bdn->bcd", xf, xf, precision=HIGHEST)
    ca = jnp.einsum("bcd,bde->bce", ca1, ca1, precision=HIGHEST)
    ca_new = jnp.max(ca, axis=-1, keepdims=True) - ca
    ca_sm = jax.nn.softmax(ca_new, axis=-1)
    w_c = jnp.einsum("bcd,bdn->bcn", ca_sm, xf, precision=HIGHEST)
    cab = params["gamma_cab"] * w_c + xf
    return (sab + cab + xf).reshape(B, C, H, W, D)


if __name__ == "__main__":
    key = jax.random.PRNGKey(0)
    B, C, H, W, D = 2, 16, 8, 8, 8          # N = 512 (multiple of 128), C // 8 = 2
    C8 = C // 8
    ks = jax.random.split(key, 10)

    x = 0.5 * jax.random.normal(ks[0], (B, C, H, W, D), jnp.float32)
    scale = 0.1
    params = dict(
        wq=scale * jax.random.normal(ks[1], (C8, C, 1, 3, 1), jnp.float32),
        bq=scale * jax.random.normal(ks[2], (C8,), jnp.float32),
        wk=scale * jax.random.normal(ks[3], (C8, C, 3, 1, 1), jnp.float32),
        bk=scale * jax.random.normal(ks[4], (C8,), jnp.float32),
        wj=scale * jax.random.normal(ks[5], (C8, C, 1, 1, 3), jnp.float32),
        bj=scale * jax.random.normal(ks[6], (C8,), jnp.float32),
        wv=scale * jax.random.normal(ks[7], (C, C), jnp.float32),
        bv=scale * jax.random.normal(ks[8], (C,), jnp.float32),
        # PyTorch initializes both gammas to 0 (output degenerates to 3*x); use
        # deterministic nonzero values so both attention paths are exercised.
        gamma_sab=0.1,
        gamma_cab=0.2,
    )

    # tile_n=128 -> 4 accumulated row-tiles per batch element (grid = (2, 4))
    out = affinity_attention_3d(params, x, tile_n=128)
    jax.block_until_ready(out)

    ref = reference_forward(params, x)
    err = float(jnp.max(jnp.abs(out - ref)))
    assert err < 2e-2, f"max abs error too large: {err}"
    print("KERNEL_OK")
</pallas_src>

<mosaic_0001>
module attributes {stable_mosaic.version = 11 : i64} {
  func.func @kernel(%arg0: i32, %arg1: i32, %arg2: memref<1x4x512xbf16, #tpu.memory_space<vmem>>, %arg3: memref<1x16x512xbf16, #tpu.memory_space<vmem>>, %arg4: memref<1x16x512xf32, #tpu.memory_space<vmem>>, %arg5: memref<1x16x512xf32, #tpu.memory_space<vmem>>) attributes {dimension_semantics = [#tpu.dimension_semantics<parallel>, #tpu.dimension_semantics<arbitrary>], iteration_bounds = array<i64: 2, 4>, scalar_prefetch = 0 : i64, scratch_operands = 0 : i64, tpu.core_type = #tpu.core_type<tc>, window_params = [{transform_indices = @transform_0, window_bounds = array<i64: 1, 4, 512>}, {transform_indices = @transform_1, window_bounds = array<i64: 1, 16, 512>}, {transform_indices = @transform_2, window_bounds = array<i64: 1, 16, 512>}, {transform_indices = @transform_3, window_bounds = array<i64: 1, 16, 512>}]} {
    %c0_i32 = arith.constant 0 : i32
    %0 = arith.cmpi eq, %arg1, %c0_i32 : i32
    %1 = arith.extui %0 : i1 to i32
    %c0_i32_0 = arith.constant 0 : i32
    %2 = arith.cmpi ne, %1, %c0_i32_0 : i32
    scf.if %2 {
      %c0_16 = arith.constant 0 : index
      %c0_17 = arith.constant 0 : index
      %c0_18 = arith.constant 0 : index
      %34 = vector.load %arg4[%c0_16, %c0_17, %c0_18] : memref<1x16x512xf32, #tpu.memory_space<vmem>>, vector<1x16x512xf32>
      %35 = vector.shape_cast %34 : vector<1x16x512xf32> to vector<16x512xf32>
      %c0_19 = arith.constant 0 : index
      %c0_20 = arith.constant 0 : index
      %c0_21 = arith.constant 0 : index
      %36 = vector.load %arg5[%c0_19, %c0_20, %c0_21] : memref<1x16x512xf32, #tpu.memory_space<vmem>>, vector<1x16x512xf32>
      %37 = vector.shape_cast %36 : vector<1x16x512xf32> to vector<16x512xf32>
      %38 = vector.shape_cast %35 : vector<16x512xf32> to vector<1x16x512xf32>
      tpu.vector_store %arg5[%c0_19, %c0_20, %c0_21], %38 {strides = array<i32>} : memref<1x16x512xf32, #tpu.memory_space<vmem>>, vector<1x16x512xf32>,
    } else {
    }
    %c128_i32 = arith.constant 128 : i32
    %3 = arith.muli %arg1, %c128_i32 : i32
    %4 = tpu.assume_multiple %3, 128 : i32
    %c0 = arith.constant 0 : index
    %c0_1 = arith.constant 0 : index
    %c0_2 = arith.constant 0 : index
    %5 = vector.load %arg2[%c0, %c0_1, %c0_2] : memref<1x4x512xbf16, #tpu.memory_space<vmem>>, vector<1x2x512xbf16>
    %6 = vector.shape_cast %5 : vector<1x2x512xbf16> to vector<2x512xbf16>
    %c0_3 = arith.constant 0 : index
    %c2 = arith.constant 2 : index
    %7 = arith.index_cast %4 : i32 to index
    %8 = vector.load %arg2[%c0_3, %c2, %7] : memref<1x4x512xbf16, #tpu.memory_space<vmem>>, vector<1x2x128xbf16>
    %9 = vector.shape_cast %8 : vector<1x2x128xbf16> to vector<2x128xbf16>
    %cst = arith.constant dense<0.000000e+00> : vector<128x512xf32>
    %10 = tpu.matmul %9, %6, %cst {dimension_numbers = #tpu.dot_dimension_numbers<[0], [0], [1], [1], [0, 1, 1, 1], [], []>} : vector<2x128xbf16>, vector<2x512xbf16>, vector<128x512xf32> -> vector<128x512xf32>
    %cst_4 = arith.constant dense<0xFF800000> : vector<128xf32>
    %11 = vector.multi_reduction <maximumf>, %10, %cst_4 [1] : vector<128x512xf32> to vector<128xf32>
    %12 = vector.shape_cast %11 : vector<128xf32> to vector<128x1xf32>
    %13 = vector.broadcast %12 : vector<128x1xf32> to vector<128x512xf32>
    %14 = arith.subf %10, %13 : vector<128x512xf32>
    %15 = arith.truncf %14 : vector<128x512xf32> to vector<128x512xbf16>
    %16 = math.exp %15 : vector<128x512xbf16>
    %cst_5 = arith.constant 1.000000e+00 : bf16
    %17 = vector.broadcast %cst_5 : bf16 to vector<1x512xbf16>
    %cst_6 = arith.constant dense<0.000000e+00> : vector<1x128xf32>
    %18 = tpu.matmul %17, %16, %cst_6 {dimension_numbers = #tpu.dot_dimension_numbers<[1], [1], [0], [0], [0, 0, 1, 0], [], []>} : vector<1x512xbf16>, vector<128x512xbf16>, vector<1x128xf32> -> vector<1x128xf32>
    %19 = tpu.reciprocal %18 {approx = true} : vector<1x128xf32> -> vector<1x128xf32>
    %c0_7 = arith.constant 0 : index
    %c0_8 = arith.constant 0 : index
    %20 = arith.index_cast %4 : i32 to index
    %21 = vector.load %arg3[%c0_7, %c0_8, %20] : memref<1x16x512xbf16, #tpu.memory_space<vmem>>, vector<1x16x128xbf16>
    %22 = vector.shape_cast %21 : vector<1x16x128xbf16> to vector<16x128xbf16>
    %23 = arith.extf %22 : vector<16x128xbf16> to vector<16x128xf32>
    %24 = vector.broadcast %19 : vector<1x128xf32> to vector<16x128xf32>
    %25 = arith.mulf %23, %24 : vector<16x128xf32>
    %26 = arith.truncf %25 : vector<16x128xf32> to vector<16x128xbf16>
    %c0_9 = arith.constant 0 : index
    %c0_10 = arith.constant 0 : index
    %c0_11 = arith.constant 0 : index
    %27 = vector.load %arg5[%c0_9, %c0_10, %c0_11] : memref<1x16x512xf32, #tpu.memory_space<vmem>>, vector<1x16x512xf32>
    %28 = vector.shape_cast %27 : vector<1x16x512xf32> to vector<16x512xf32>
    %cst_12 = arith.constant dense<0.000000e+00> : vector<16x512xf32>
    %29 = tpu.matmul %26, %16, %cst_12 {dimension_numbers = #tpu.dot_dimension_numbers<[1], [0], [0], [1], [0, 0, 1, 1], [], []>} : vector<16x128xbf16>, vector<128x512xbf16>, vector<16x512xf32> -> vector<16x512xf32>
    %30 = arith.addf %28, %29 : vector<16x512xf32>
    %c0_13 = arith.constant 0 : index
    %c0_14 = arith.constant 0 : index
    %c0_15 = arith.constant 0 : index
    %31 = vector.load %arg5[%c0_13, %c0_14, %c0_15] : memref<1x16x512xf32, #tpu.memory_space<vmem>>, vector<1x16x512xf32>
    %32 = vector.shape_cast %31 : vector<1x16x512xf32> to vector<16x512xf32>
    %33 = vector.shape_cast %30 : vector<16x512xf32> to vector<1x16x512xf32>
    tpu.vector_store %arg5[%c0_13, %c0_14, %c0_15], %33 {strides = array<i32>} : memref<1x16x512xf32, #tpu.memory_space<vmem>>, vector<1x16x512xf32>,
    return
  }
  func.func @transform_0(%arg0: i32, %arg1: i32) -> (i32, i32, i32) {
    %c0_i32 = arith.constant 0 : i32
    %c0_i32_0 = arith.constant 0 : i32
    %c0_i32_1 = arith.constant 0 : i32
    return %arg0, %c0_i32, %c0_i32_0 : i32, i32, i32
  }
  func.func @transform_1(%arg0: i32, %arg1: i32) -> (i32, i32, i32) {
    %c0_i32 = arith.constant 0 : i32
    %c0_i32_0 = arith.constant 0 : i32
    %c0_i32_1 = arith.constant 0 : i32
    return %arg0, %c0_i32, %c0_i32_0 : i32, i32, i32
  }
  func.func @transform_2(%arg0: i32, %arg1: i32) -> (i32, i32, i32) {
    %c0_i32 = arith.constant 0 : i32
    %c0_i32_0 = arith.constant 0 : i32
    %c0_i32_1 = arith.constant 0 : i32
    return %arg0, %c0_i32, %c0_i32_0 : i32, i32, i32
  }
  func.func @transform_3(%arg0: i32, %arg1: i32) -> (i32, i32, i32) {
    %c0_i32 = arith.constant 0 : i32
    %c0_i32_0 = arith.constant 0 : i32
    %c0_i32_1 = arith.constant 0 : i32
    return %arg0, %c0_i32, %c0_i32_0 : i32, i32, i32
  }
}

</mosaic_0001>

<llo_original>
// kernel: tpu_custom_call.1
$region0: #{tpu_custom_call.1}
  #allocation0 [shape = 'u32[]', space=smem, size = 0x4, offset = 0x4, fixed_abs, tag = 'smem constant byte address 0x4 - core index']
  #allocation1 [shape = 'u32[144,128]{1,0:T(1,128)}', space=vmem, size = 0x12000, scoped, tag = 'internal scratch']
  %s0 = inlined_call_operand.hbm [shape: bf16[2,4,512], index: 0, kind: input, shape index: {}]
  %s1 = inlined_call_operand.hbm [shape: bf16[2,16,512], index: 1, kind: input, shape index: {}]
  %s2 = inlined_call_operand.hbm [shape: f32[2,16,512], index: 2, kind: input, shape index: {}]
  %s3 = inlined_call_operand.hbm [shape: f32[2,16,512], index: 3, kind: output, shape index: {}]
  %s4 = sld [smem:[#allocation0]]
  $region61: #{tpu_custom_call.1} parent=0
    _
  %s6 = ssub.s32 1, %s4
  %s7 = scalar_select 0, %s6, %s4
  $region1: #{tpu_custom_call.1} parent=0
    #allocation2 [shape = 'u8[8192]{0}', space=vmem, size = 0x2000, scoped, tag = 'input window, operand 0']
    #allocation3 [shape = 's32[2]{0}', space=sflag, size = 0x8, scoped, tag = 'scoped memory for tpu_custom_call.1']
    #allocation4 [shape = 's32[2]{0}', space=sflag, size = 0x8, scoped, tag = 'scoped memory for tpu_custom_call.1']
    #allocation5 [shape = 'u8[32768]{0}', space=vmem, size = 0x8000, scoped, tag = 'input window, operand 1']
    #allocation6 [shape = 's32[2]{0}', space=sflag, size = 0x8, scoped, tag = 'scoped memory for tpu_custom_call.1']
    #allocation7 [shape = 'u8[65536]{0}', space=vmem, size = 0x10000, scoped, tag = 'input window, operand 2']
    #allocation8 [shape = 'u8[65536]{0}', space=vmem, size = 0x10000, scoped, tag = 'output window, operand 0']
    %8 = vsyncpa [#allocation3], 0
    %s9 = scalar_lea.sflag [#allocation3], 1
    %10 = vsyncpa %s9, 0
    %11 = vsyncpa [#allocation6], 0
    %s12 = scalar_lea.sflag [#allocation6], 1
    %13 = vsyncpa %s12, 0
    %14 = vsyncpa [#allocation4], 0
    %s15 = scalar_lea.sflag [#allocation4], 1
    %16 = vsyncpa %s15, 0
    loop: start=0, step=1, limit=10
    $region2: #{tpu_custom_call.1} parent=1 // loop_pre_header
      _
    $region3: #{tpu_custom_call.1} parent=1 // loop_header
      %s18 = sphi 0, %s22
      %p19 = scmp.ge.s32.totalorder %s18, 10
      %s25 = sphi 0, %s37
      %s26 = sphi 0, %s33
      %s27 = sphi 0, %s25
      %s28 = sphi 0, %s26
      %s29 = sphi 0, %s27
      %s30 = sphi 0, %s28
      %s40 = sphi 0, %s42
      %s43 = sphi 0, %s40
      %s44 = sphi 0, %s43
      %s60 = sphi 0, %s44
      %s66 = sphi 0, %s68
      %s69 = sphi 0, %s66
      %s70 = sphi 0, %s69
      %s86 = sphi 0, %s70
      %s92 = sphi 0, %s94
      %s95 = sphi 0, %s92
      %s96 = sphi 0, %s95
      %s112 = sphi 0, %s96
      %s118 = sphi 0, %s120
      %s121 = sphi 0, %s118
      %s122 = sphi 0, %s121
      %s138 = sphi 0, %s122
    $region4: #{tpu_custom_call.1} parent=1 // loop_header_branch
      %21 = sbr.rel (%p19) target = $region8
    $region5: #{tpu_custom_call.1} parent=1 // loop_body
      %s23 = ssub.s32 %s18, 1
      %s24 = ssub.s32 %s18, 2
      %s31 = sadd.s32 1, %s26
      %p32 = scmp.ge.s32.totalorder %s31, 4
      %s33 = scalar_select %p32, 0, %s31
      %s34 = sadd.s32 1, %s25
      %s35 = scalar_select %p32, %s34, %s25
      %p36 = scmp.ge.s32.totalorder %s35, 2
      %s37 = scalar_select %p36, 0, %s35
      %s38 = ssub.s32 %s25, %s37
      %p39 = scmp.eq.s32.totalorder %s38, 0
      %s41 = sadd.s32 %s40, 1
      %s42 = scalar_select %p39, %s40, %s41
      %p45 = pneg %p39
      %p46 = scmp.eq.s32.totalorder %s18, 7
      %p47 = por %p45, %p46
      %p48 = scmp.ne.s32.totalorder %s40, %s43
      %p49 = scmp.eq.s32.totalorder %s18, 0
      %p50 = por %p48, %p49
      %p51 = scmp.ne.s32.totalorder %s40, %s43
      %p52 = scmp.eq.s32.totalorder %s23, 7
      %p53 = por %p51, %p52
      %p54 = scmp.ne.s32.totalorder %s43, %s44
      %p55 = scmp.eq.s32.totalorder %s23, 0
      %p56 = por %p54, %p55
      %p57 = scmp.ne.s32.totalorder %s43, %s44
      %p58 = scmp.eq.s32.totalorder %s24, 7
      %p59 = por %p57, %p58
      %p61 = scmp.ne.s32.totalorder %s44, %s60
      %p62 = scmp.eq.s32.totalorder %s24, 0
      %p63 = por %p61, %p62
      %s64 = ssub.s32 %s25, %s37
      %p65 = scmp.eq.s32.totalorder %s64, 0
      %s67 = sadd.s32 %s66, 1
      %s68 = scalar_select %p65, %s66, %s67
      %p71 = pneg %p65
      %p72 = scmp.eq.s32.totalorder %s18, 7
      %p73 = por %p71, %p72
      %p74 = scmp.ne.s32.totalorder %s66, %s69
      %p75 = scmp.eq.s32.totalorder %s18, 0
      %p76 = por %p74, %p75
      %p77 = scmp.ne.s32.totalorder %s66, %s69
      %p78 = scmp.eq.s32.totalorder %s23, 7
      %p79 = por %p77, %p78
      %p80 = scmp.ne.s32.totalorder %s69, %s70
      %p81 = scmp.eq.s32.totalorder %s23, 0
      %p82 = por %p80, %p81
      %p83 = scmp.ne.s32.totalorder %s69, %s70
      %p84 = scmp.eq.s32.totalorder %s24, 7
      %p85 = por %p83, %p84
      %p87 = scmp.ne.s32.totalorder %s70, %s86
      %p88 = scmp.eq.s32.totalorder %s24, 0
      %p89 = por %p87, %p88
      %s90 = ssub.s32 %s25, %s37
      %p91 = scmp.eq.s32.totalorder %s90, 0
      %s93 = sadd.s32 %s92, 1
      %s94 = scalar_select %p91, %s92, %s93
      %p97 = pneg %p91
      %p98 = scmp.eq.s32.totalorder %s18, 7
      %p99 = por %p97, %p98
      %p100 = scmp.ne.s32.totalorder %s92, %s95
      %p101 = scmp.eq.s32.totalorder %s18, 0
      %p102 = por %p100, %p101
      %p103 = scmp.ne.s32.totalorder %s92, %s95
      %p104 = scmp.eq.s32.totalorder %s23, 7
      %p105 = por %p103, %p104
      %p106 = scmp.ne.s32.totalorder %s95, %s96
      %p107 = scmp.eq.s32.totalorder %s23, 0
      %p108 = por %p106, %p107
      %p109 = scmp.ne.s32.totalorder %s95, %s96
      %p110 = scmp.eq.s32.totalorder %s24, 7
      %p111 = por %p109, %p110
      %p113 = scmp.ne.s32.totalorder %s96, %s112
      %p114 = scmp.eq.s32.totalorder %s24, 0
      %p115 = por %p113, %p114
      %s116 = ssub.s32 %s25, %s37
      %p117 = scmp.eq.s32.totalorder %s116, 0
      %s119 = sadd.s32 %s118, 1
      %s120 = scalar_select %p117, %s118, %s119
      %p123 = pneg %p117
      %p124 = scmp.eq.s32.totalorder %s18, 7
      %p125 = por %p123, %p124
      %p126 = scmp.ne.s32.totalorder %s118, %s121
      %p127 = scmp.eq.s32.totalorder %s18, 0
      %p128 = por %p126, %p127
      %p129 = scmp.ne.s32.totalorder %s118, %s121
      %p130 = scmp.eq.s32.totalorder %s23, 7
      %p131 = por %p129, %p130
      %p132 = scmp.ne.s32.totalorder %s121, %s122
      %p133 = scmp.eq.s32.totalorder %s23, 0
      %p134 = por %p132, %p133
      %p135 = scmp.ne.s32.totalorder %s121, %s122
      %p136 = scmp.eq.s32.totalorder %s24, 7
      %p137 = por %p135, %p136
      %p139 = scmp.ne.s32.totalorder %s122, %s138
      %p140 = scmp.eq.s32.totalorder %s24, 0
      %p141 = por %p139, %p140
      %p142 = scmp.le.s32.totalorder 1, %s18
      %p143 = scmp.lt.s32.totalorder %s18, 9
      %p144 = pnand %p142, %p143
      %p145 = pneg %p144
      // Predicated region
      $region9: #{tpu_custom_call.1} parent=5 // pred_check
        _
      $region10: #{tpu_custom_call.1} parent=5 // pred_check_branch
        %147 = sbr.rel (%p144) target = $region12
      $region11: #{tpu_custom_call.1} parent=5 // pred_region
        %s148 = ssub.s32 %s18, 1
      $region12: #{tpu_custom_call.1} parent=5 // pred_fallthru
        _
      %p149 = scmp.lt.s32.totalorder %s18, 8
      // Predicated region
      $region13: #{tpu_custom_call.1} parent=5 // pred_check
        %p150 = pneg %p149
      $region14: #{tpu_custom_call.1} parent=5 // pred_check_branch
        %152 = sbr.rel (%p150) target = $region16
      $region15: #{tpu_custom_call.1} parent=5 // pred_region
        // Predicated region
        $region17: #{tpu_custom_call.1} parent=15 // pred_check
          %p153 = pneg %p50
        $region18: #{tpu_custom_call.1} parent=15 // pred_check_branch
          %155 = sbr.rel (%p153) target = $region20
        $region19: #{tpu_custom_call.1} parent=15 // pred_region
          %s156 = sand.u32 %s40, 1
          %s157 = scalar_lea.sflag [#allocation3], %s156
          %s158 = sand.u32 %s40, 1
          %s159 = smul.addr %s158, 8
          %s160 = scalar_lea.vmem [#allocation2], %s159
          %s162 = ssub.s32 128, 128
          %163 = vsyncadd %s157, %s162
          %s164 = smul.addr %s25, 4
          %s165 = smul.addr %s164, 32
          %s166 = scalar_lea.hbm %s0, %s165
          %s168 = sshll.u32 %s160, 4
          %s169 = int_to_ptr.vmem [resolvable:$true] %s168
          %171 = dma.hbm_to_vmem [thread:$0]  %s166, 128, %s169, %s157
        $region20: #{tpu_custom_call.1} parent=15 // pred_fallthru
          _
        // Predicated region
        $region21: #{tpu_custom_call.1} parent=15 // pred_check
          %p172 = pneg %p76
        $region22: #{tpu_custom_call.1} parent=15 // pred_check_branch
          %174 = sbr.rel (%p172) target = $region24
        $region23: #{tpu_custom_call.1} parent=15 // pred_region
          %s175 = sand.u32 %s18, 1
          %s176 = scalar_lea.sflag [#allocation6], %s175
          %s177 = sand.u32 %s66, 1
          %s178 = smul.addr %s177, 32
          %s179 = scalar_lea.vmem [#allocation5], %s178
          %s181 = ssub.s32 512, 512
          %182 = vsyncadd %s176, %s181
          %s183 = smul.addr %s25, 8
          %s184 = smul.addr %s183, 64
          %s185 = scalar_lea.hbm %s1, %s184
          %s186 = sshll.u32 %s179, 4
          %s187 = int_to_ptr.vmem [resolvable:$true] %s186
          %192 = dma.hbm_to_vmem [thread:$0]  %s185, 512, %s187, %s176, 256, 256, 16
        $region24: #{tpu_custom_call.1} parent=15 // pred_fallthru
          _
        // Predicated region
        $region25: #{tpu_custom_call.1} parent=15 // pred_check
          %p193 = pneg %p102
        $region26: #{tpu_custom_call.1} parent=15 // pred_check_branch
          %195 = sbr.rel (%p193) target = $region28
        $region27: #{tpu_custom_call.1} parent=15 // pred_region
          %s196 = sand.u32 %s18, 1
          %s197 = scalar_lea.sflag [#allocation6], %s196
          %s198 = sand.u32 %s92, 1
          %s199 = smul.addr %s198, 64
          %s200 = scalar_lea.vmem [#allocation7], %s199
          %s202 = ssub.s32 1024, 1024
          %203 = vsyncadd %s197, %s202
          %s204 = smul.addr %s25, 8
          %s205 = smul.addr %s204, 128
          %s206 = scalar_lea.hbm %s2, %s205
          %s207 = sshll.u32 %s200, 4
          %s208 = int_to_ptr.vmem [resolvable:$true] %s207
          %213 = dma.hbm_to_vmem [thread:$0]  %s206, 1024, %s208, %s197, 512, 512, 32
        $region28: #{tpu_custom_call.1} parent=15 // pred_fallthru
          _
      $region16: #{tpu_custom_call.1} parent=5 // pred_fallthru
        _
      %p214 = scmp.le.s32.totalorder 1, %s18
      %p215 = scmp.lt.s32.totalorder %s18, 9
      %p216 = pnand %p214, %p215
      %p217 = pneg %p216
      // Predicated region
      $region29: #{tpu_custom_call.1} parent=5 // pred_check
        _
      $region30: #{tpu_custom_call.1} parent=5 // pred_check_branch
        %219 = sbr.rel (%p216) target = $region32
      $region31: #{tpu_custom_call.1} parent=5 // pred_region
        %s220 = ssub.s32 %s18, 1
        %s221 = sand.u32 %s43, 1
        %s222 = scalar_lea.sflag [#allocation3], %s221
        %s223 = sand.u32 %s43, 1
        %s224 = smul.addr %s223, 8
        %s225 = scalar_lea.vmem [#allocation2], %s224
        // Predicated region
        $region33: #{tpu_custom_call.1} parent=31 // pred_check
          %p226 = pneg %p56
        $region34: #{tpu_custom_call.1} parent=31 // pred_check_branch
          %228 = sbr.rel (%p226) target = $region36
        $region35: #{tpu_custom_call.1} parent=31 // pred_region
          %229 = dma.done %s222, 128
        $region36: #{tpu_custom_call.1} parent=31 // pred_fallthru
          _
        %s230 = sand.u32 %s23, 1
        %s231 = scalar_lea.sflag [#allocation6], %s230
        %s232 = sand.u32 %s69, 1
        %s233 = smul.addr %s232, 32
        %s234 = scalar_lea.vmem [#allocation5], %s233
        // Predicated region
        $region37: #{tpu_custom_call.1} parent=31 // pred_check
          %p235 = pneg %p82
        $region38: #{tpu_custom_call.1} parent=31 // pred_check_branch
          %237 = sbr.rel (%p235) target = $region40
        $region39: #{tpu_custom_call.1} parent=31 // pred_region
          %238 = dma.done %s231, 512
        $region40: #{tpu_custom_call.1} parent=31 // pred_fallthru
          _
        %s239 = sand.u32 %s23, 1
        %s240 = scalar_lea.sflag [#allocation6], %s239
        %s241 = sand.u32 %s95, 1
        %s242 = smul.addr %s241, 64
        %s243 = scalar_lea.vmem [#allocation7], %s242
        // Predicated region
        $region41: #{tpu_custom_call.1} parent=31 // pred_check
          %p244 = pneg %p108
        $region42: #{tpu_custom_call.1} parent=31 // pred_check_branch
          %246 = sbr.rel (%p244) target = $region44
        $region43: #{tpu_custom_call.1} parent=31 // pred_region
          %247 = dma.done %s240, 1024
        $region44: #{tpu_custom_call.1} parent=31 // pred_fallthru
          _
        %s248 = sand.u32 %s43, 1
        %s249 = scalar_lea.sflag [#allocation3], %s248
        %s250 = sand.u32 %s43, 1
        %s251 = smul.addr %s250, 8
        %s252 = scalar_lea.vmem [#allocation2], %s251
        %p253 = pneg %p56
        %p254 = pneg %p53
        %s255 = sand.u32 %s23, 1
        %s256 = scalar_lea.sflag [#allocation6], %s255
        %s257 = sand.u32 %s69, 1
        %s258 = smul.addr %s257, 32
        %s259 = scalar_lea.vmem [#allocation5], %s258
        %p260 = pneg %p82
        %p261 = pneg %p79
        %s262 = sand.u32 %s23, 1
        %s263 = scalar_lea.sflag [#allocation6], %s262
        %s264 = sand.u32 %s95, 1
        %s265 = smul.addr %s264, 64
        %s266 = scalar_lea.vmem [#allocation7], %s265
        %p267 = pneg %p108
        %p268 = pneg %p105
        %p269 = pneg %p134
        %p270 = pneg %p131
        %s271 = sand.u32 %s121, 1
        %s272 = scalar_lea.sflag [#allocation4], %s271
        %s273 = sand.u32 %s121, 1
        %s274 = smul.addr %s273, 64
        %s275 = scalar_lea.vmem [#allocation8], %s274
        %p278 = scmp.eq.s32.totalorder %s28, 0
        // Predicated region
        $region45: #{tpu_custom_call.1} parent=31 // pred_check
          %p279 = pneg %p278
        $region46: #{tpu_custom_call.1} parent=31 // pred_check_branch
          %281 = sbr.rel (%p279) target = $region48
        $region47: #{tpu_custom_call.1} parent=31 // pred_region
          %v282 = vld [vmem:[%s243] sm:$0xff]
          %v283 = vld [vmem:[%s243 + $0x8] sm:$0xff]
          %v284 = vld [vmem:[%s243 + $0x10] sm:$0xff]
          %v285 = vld [vmem:[%s243 + $0x18] sm:$0xff]
          %v286 = vld [vmem:[%s243 + $0x20] sm:$0xff]
          %v287 = vld [vmem:[%s243 + $0x28] sm:$0xff]
          %v288 = vld [vmem:[%s243 + $0x30] sm:$0xff]
          %v289 = vld [vmem:[%s243 + $0x38] sm:$0xff]
          %290 = vst [vmem:[%s275] sm:$0xff] %v282
          %291 = vst [vmem:[%s275 + $0x8] sm:$0xff] %v283
          %292 = vst [vmem:[%s275 + $0x10] sm:$0xff] %v284
          %293 = vst [vmem:[%s275 + $0x18] sm:$0xff] %v285
          %294 = vst [vmem:[%s275 + $0x20] sm:$0xff] %v286
          %295 = vst [vmem:[%s275 + $0x28] sm:$0xff] %v287
          %296 = vst [vmem:[%s275 + $0x30] sm:$0xff] %v288
          %297 = vst [vmem:[%s275 + $0x38] sm:$0xff] %v289
        $region48: #{tpu_custom_call.1} parent=31 // pred_fallthru
          _
        %s298 = smul.u32 %s28, 128
        %v299 = vld [vmem:[%s225] sm:$0x55]
        %s300 = sshra.s32 %s298, 7
        %s301 = sand.u32 %s298, 127
        %s302 = smul.addr %s300, 2
        %s303 = scalar_lea.vmem %s225, %s302 [#allocation2]
        %v304 = vld [vmem:[%s303] sm:$0x2]
        %v307 = vunpack.c.l.s4 1983009808
        %v308 = vunpack.c.0.s8 %v307
        %v309 = vlaneseq
        %v310 = vshrl.u32 %v309, 7
        %v311 = vsub.s32 %v308, %v310
        %v312 = vrot.slane %v304, %v311
        %v313 = vrot.slane %v312, 1
        %315 = vxpose.xlu0.c.b16.start [1/8] %v313, 128
        %316 = vxpose.xlu0.c.b16.cont [2/8] 0, 128
        %317 = vxpose.xlu0.c.b16.cont [3/8] 0, 128
        %318 = vxpose.xlu0.c.b16.cont [4/8] 0, 128
        %319 = vxpose.xlu0.c.b16.cont [5/8] 0, 128
        %320 = vxpose.xlu0.c.b16.cont [6/8] 0, 128
        %321 = vxpose.xlu0.c.b16.cont [7/8] 0, 128
        %322 = vxpose.xlu0.c.b16.end [8/8] 0, 128
        %v323 = vpop.trf.xlu0
        %v324 = vpop.trf.xlu0
        %v325 = vpop.trf.xlu0
        %v326 = vpop.trf.xlu0
        %v327 = vpop.trf.xlu0
        %v328 = vpop.trf.xlu0
        %v329 = vpop.trf.xlu0
        %v330 = vpop.trf.xlu0
        %v332 = vcombine.high %v299, %v299
        %v334 = vunpack.c.l.s4 1983009808
        %v335 = vunpack.c.0.s8 %v334
        %v336 = vlaneseq
        %v337 = vshrl.u32 %v336, 7
        %v338 = vsub.s32 %v335, %v337
        %v339 = vrot.slane %v299, %v338
        %v341 = vunpack.c.l.s4 1983009808
        %v342 = vunpack.c.0.s8 %v341
        %v343 = vlaneseq
        %v344 = vshrl.u32 %v343, 7
        %v345 = vsub.s32 %v342, %v344
        %v346 = vrot.slane %v332, %v345
        %v347 = vcombine.high %v339, %v339
        %v348 = vcombine.high %v346, %v346
        %vm349 = vcmask 15360
        %v351 = vsel %vm349, %v323, 0
        %v354 = vsel %vm349, %v324, 0
        %v357 = vsel %vm349, %v325, 0
        %v360 = vsel %vm349, %v326, 0
        %v363 = vsel %vm349, %v327, 0
        %v366 = vsel %vm349, %v328, 0
        %v369 = vsel %vm349, %v329, 0
        %v372 = vsel %vm349, %v330, 0
        %vm374 = vcmask 1040384
        %v376 = vsel %vm374, %v339, 0
        %v379 = vsel %vm374, %v347, 0
        %v382 = vsel %vm374, %v346, 0
        %v385 = vsel %vm374, %v348, 0
        %387 = vmatprep.subr.bf16.mxu0 %v379
        %388 = vmatpush1.bf16.msra.mxu0 %v376
        %389 = vmatprep.subr.bf16.mxu0 0
        %390 = vmatpush1.bf16.msra.mxu0 0
        %391 = vmatprep.subr.bf16.mxu0 0
        %392 = vmatpush1.bf16.msra.mxu0 0
        %393 = vmatprep.subr.bf16.mxu0 0
        %394 = vmatpush1.bf16.msra.mxu0 0
        %395 = vmatprep.subr.bf16.mxu0 0
        %396 = vmatpush1.bf16.msra.mxu0 0
        %397 = vmatprep.subr.bf16.mxu0 0
        %398 = vmatpush1.bf16.msra.mxu0 0
        %399 = vmatprep.subr.bf16.mxu0 0
        %400 = vmatpush1.bf16.msra.mxu0 0
        %401 = vmatprep.subr.bf16.mxu0 0
        %402 = vmatpush1.bf16.msra.mxu0 0
        %403 = vmatprep.subr.bf16.mxu0 0
        %404 = vmatpush1.bf16.msra.mxu0 0
        %405 = vmatprep.subr.bf16.mxu0 0
        %406 = vmatpush1.bf16.msra.mxu0 0
        %407 = vmatprep.subr.bf16.mxu0 0
        %408 = vmatpush1.bf16.msra.mxu0 0
        %409 = vmatprep.subr.bf16.mxu0 0
        %410 = vmatpush1.bf16.msra.mxu0 0
        %411 = vmatprep.subr.bf16.mxu0 0
        %412 = vmatpush1.bf16.msra.mxu0 0
        %413 = vmatprep.subr.bf16.mxu0 0
        %414 = vmatpush1.bf16.msra.mxu0 0
        %415 = vmatprep.subr.bf16.mxu0 0
        %416 = vmatpush1.bf16.msra.mxu0 0
        %417 = vmatprep.subr.bf16.mxu0 0
        %418 = vmatpush1.bf16.msra.mxu0 0
        %419 = vmatprep.mubr.bf16.mxu0 0
        %420 = vmatmul.mubr.bf16.gmra.mrb[0].mxu0 %v351
        %v421 = vpop.f32.mrb[0].mxu0
        %v422 = vadd.f32 0.0, %v421
        %v423 = vpop.f32.mrb[0].mxu0
        %v424 = vadd.f32 0.0, %v423
        %v425 = vpop.f32.mrb[0].mxu0
        %v426 = vadd.f32 0.0, %v425
        %v427 = vpop.f32.mrb[0].mxu0
        %v428 = vadd.f32 0.0, %v427
        %429 = vmatprep.mubr.bf16.mxu0 0
        %430 = vmatmul.mubr.bf16.gmra.mrb[0].mxu0 %v354
        %v431 = vpop.f32.mrb[0].mxu0
        %v432 = vadd.f32 0.0, %v431
        %v433 = vpop.f32.mrb[0].mxu0
        %v434 = vadd.f32 0.0, %v433
        %v435 = vpop.f32.mrb[0].mxu0
        %v436 = vadd.f32 0.0, %v435
        %v437 = vpop.f32.mrb[0].mxu0
        %v438 = vadd.f32 0.0, %v437
        %439 = vmatprep.mubr.bf16.mxu0 0
        %440 = vmatmul.mubr.bf16.gmra.mrb[0].mxu0 %v357
        %v441 = vpop.f32.mrb[0].mxu0
        %v442 = vadd.f32 0.0, %v441
        %v443 = vpop.f32.mrb[0].mxu0
        %v444 = vadd.f32 0.0, %v443
        %v445 = vpop.f32.mrb[0].mxu0
        %v446 = vadd.f32 0.0, %v445
        %v447 = vpop.f32.mrb[0].mxu0
        %v448 = vadd.f32 0.0, %v447
        %449 = vmatprep.mubr.bf16.mxu0 0
        %450 = vmatmul.mubr.bf16.gmra.mrb[0].mxu0 %v360
        %v451 = vpop.f32.mrb[0].mxu0
        %v452 = vadd.f32 0.0, %v451
        %v453 = vpop.f32.mrb[0].mxu0
        %v454 = vadd.f32 0.0, %v453
        %v455 = vpop.f32.mrb[0].mxu0
        %v456 = vadd.f32 0.0, %v455
        %v457 = vpop.f32.mrb[0].mxu0
        %v458 = vadd.f32 0.0, %v457
        %459 = vmatprep.mubr.bf16.mxu0 0
        %460 = vmatmul.mubr.bf16.gmra.mrb[0].mxu0 %v363
        %v461 = vpop.f32.mrb[0].mxu0
        %v462 = vadd.f32 0.0, %v461
        %v463 = vpop.f32.mrb[0].mxu0
        %v464 = vadd.f32 0.0, %v463
        %v465 = vpop.f32.mrb[0].mxu0
        %v466 = vadd.f32 0.0, %v465
        %v467 = vpop.f32.mrb[0].mxu0
        %v468 = vadd.f32 0.0, %v467
        %469 = vmatprep.mubr.bf16.mxu0 0
        %470 = vmatmul.mubr.bf16.gmra.mrb[0].mxu0 %v366
        %v471 = vpop.f32.mrb[0].mxu0
        %v472 = vadd.f32 0.0, %v471
        %v473 = vpop.f32.mrb[0].mxu0
        %v474 = vadd.f32 0.0, %v473
        %v475 = vpop.f32.mrb[0].mxu0
        %v476 = vadd.f32 0.0, %v475
        %v477 = vpop.f32.mrb[0].mxu0
        %v478 = vadd.f32 0.0, %v477
        %479 = vmatprep.mubr.bf16.mxu0 0
        %480 = vmatmul.mubr.bf16.gmra.mrb[0].mxu0 %v369
        %v481 = vpop.f32.mrb[0].mxu0
        %v482 = vadd.f32 0.0, %v481
        %v483 = vpop.f32.mrb[0].mxu0
        %v484 = vadd.f32 0.0, %v483
        %v485 = vpop.f32.mrb[0].mxu0
        %v486 = vadd.f32 0.0, %v485
        %v487 = vpop.f32.mrb[0].mxu0
        %v488 = vadd.f32 0.0, %v487
        %489 = vmatprep.mubr.bf16.mxu0 0
        %490 = vmatmul.mubr.bf16.gmra.mrb[0].mxu0 %v372
        %v491 = vpop.f32.mrb[0].mxu0
        %v492 = vadd.f32 0.0, %v491
        %v493 = vpop.f32.mrb[0].mxu0
        %v494 = vadd.f32 0.0, %v493
        %v495 = vpop.f32.mrb[0].mxu0
        %v496 = vadd.f32 0.0, %v495
        %v497 = vpop.f32.mrb[0].mxu0
        %v498 = vadd.f32 0.0, %v497
        %499 = vdwg.mxu0
        %500 = vmatprep.subr.bf16.mxu0 %v385
        %501 = vmatpush1.bf16.msra.mxu0 %v382
        %502 = vmatprep.subr.bf16.mxu0 0
        %503 = vmatpush1.bf16.msra.mxu0 0
        %504 = vmatprep.subr.bf16.mxu0 0
        %505 = vmatpush1.bf16.msra.mxu0 0
        %506 = vmatprep.subr.bf16.mxu0 0
        %507 = vmatpush1.bf16.msra.mxu0 0
        %508 = vmatprep.subr.bf16.mxu0 0
        %509 = vmatpush1.bf16.msra.mxu0 0
        %510 = vmatprep.subr.bf16.mxu0 0
        %511 = vmatpush1.bf16.msra.mxu0 0
        %512 = vmatprep.subr.bf16.mxu0 0
        %513 = vmatpush1.bf16.msra.mxu0 0
        %514 = vmatprep.subr.bf16.mxu0 0
        %515 = vmatpush1.bf16.msra.mxu0 0
        %516 = vmatprep.subr.bf16.mxu0 0
        %517 = vmatpush1.bf16.msra.mxu0 0
        %518 = vmatprep.subr.bf16.mxu0 0
        %519 = vmatpush1.bf16.msra.mxu0 0
        %520 = vmatprep.subr.bf16.mxu0 0
        %521 = vmatpush1.bf16.msra.mxu0 0
        %522 = vmatprep.subr.bf16.mxu0 0
        %523 = vmatpush1.bf16.msra.mxu0 0
        %524 = vmatprep.subr.bf16.mxu0 0
        %525 = vmatpush1.bf16.msra.mxu0 0
        %526 = vmatprep.subr.bf16.mxu0 0
        %527 = vmatpush1.bf16.msra.mxu0 0
        %528 = vmatprep.subr.bf16.mxu0 0
        %529 = vmatpush1.bf16.msra.mxu0 0
        %530 = vmatprep.subr.bf16.mxu0 0
        %531 = vmatpush1.bf16.msra.mxu0 0
        %532 = vmatprep.mubr.bf16.mxu0 0
        %533 = vmatmul.mubr.bf16.gmra.mrb[0].mxu0 %v351
        %v534 = vpop.f32.mrb[0].mxu0
        %v535 = vadd.f32 0.0, %v534
        %v536 = vpop.f32.mrb[0].mxu0
        %v537 = vadd.f32 0.0, %v536
        %v538 = vpop.f32.mrb[0].mxu0
        %v539 = vadd.f32 0.0, %v538
        %v540 = vpop.f32.mrb[0].mxu0
        %v541 = vadd.f32 0.0, %v540
        %542 = vmatprep.mubr.bf16.mxu0 0
        %543 = vmatmul.mubr.bf16.gmra.mrb[0].mxu0 %v354
        %v544 = vpop.f32.mrb[0].mxu0
        %v545 = vadd.f32 0.0, %v544
        %v546 = vpop.f32.mrb[0].mxu0
        %v547 = vadd.f32 0.0, %v546
        %v548 = vpop.f32.mrb[0].mxu0
        %v549 = vadd.f32 0.0, %v548
        %v550 = vpop.f32.mrb[0].mxu0
        %v551 = vadd.f32 0.0, %v550
        %552 = vmatprep.mubr.bf16.mxu0 0
        %553 = vmatmul.mubr.bf16.gmra.mrb[0].mxu0 %v357
        %v554 = vpop.f32.mrb[0].mxu0
        %v555 = vadd.f32 0.0, %v554
        %v556 = vpop.f32.mrb[0].mxu0
        %v557 = vadd.f32 0.0, %v556
        %v558 = vpop.f32.mrb[0].mxu0
        %v559 = vadd.f32 0.0, %v558
        %v560 = vpop.f32.mrb[0].mxu0
        %v561 = vadd.f32 0.0, %v560
        %562 = vmatprep.mubr.bf16.mxu0 0
        %563 = vmatmul.mubr.bf16.gmra.mrb[0].mxu0 %v360
        %v564 = vpop.f32.mrb[0].mxu0
        %v565 = vadd.f32 0.0, %v564
        %v566 = vpop.f32.mrb[0].mxu0
        %v567 = vadd.f32 0.0, %v566
        %v568 = vpop.f32.mrb[0].mxu0
        %v569 = vadd.f32 0.0, %v568
        %v570 = vpop.f32.mrb[0].mxu0
        %v571 = vadd.f32 0.0, %v570
        %572 = vmatprep.mubr.bf16.mxu0 0
        %573 = vmatmul.mubr.bf16.gmra.mrb[0].mxu0 %v363
        %v574 = vpop.f32.mrb[0].mxu0
        %v575 = vadd.f32 0.0, %v574
        %v576 = vpop.f32.mrb[0].mxu0
        %v577 = vadd.f32 0.0, %v576
        %v578 = vpop.f32.mrb[0].mxu0
        %v579 = vadd.f32 0.0, %v578
        %v580 = vpop.f32.mrb[0].mxu0
        %v581 = vadd.f32 0.0, %v580
        %582 = vmatprep.mubr.bf16.mxu0 0
        %583 = vmatmul.mubr.bf16.gmra.mrb[0].mxu0 %v366
        %v584 = vpop.f32.mrb[0].mxu0
        %v585 = vadd.f32 0.0, %v584
        %v586 = vpop.f32.mrb[0].mxu0
        %v587 = vadd.f32 0.0, %v586
        %v588 = vpop.f32.mrb[0].mxu0
        %v589 = vadd.f32 0.0, %v588
        %v590 = vpop.f32.mrb[0].mxu0
        %v591 = vadd.f32 0.0, %v590
        %592 = vmatprep.mubr.bf16.mxu0 0
        %593 = vmatmul.mubr.bf16.gmra.mrb[0].mxu0 %v369
        %v594 = vpop.f32.mrb[0].mxu0
        %v595 = vadd.f32 0.0, %v594
        %v596 = vpop.f32.mrb[0].mxu0
        %v597 = vadd.f32 0.0, %v596
        %v598 = vpop.f32.mrb[0].mxu0
        %v599 = vadd.f32 0.0, %v598
        %v600 = vpop.f32.mrb[0].mxu0
        %v601 = vadd.f32 0.0, %v600
        %602 = vmatprep.mubr.bf16.mxu0 0
        %603 = vmatmul.mubr.bf16.gmra.mrb[0].mxu0 %v372
        %v604 = vpop.f32.mrb[0].mxu0
        %v605 = vadd.f32 0.0, %v604
        %v606 = vpop.f32.mrb[0].mxu0
        %v607 = vadd.f32 0.0, %v606
        %v608 = vpop.f32.mrb[0].mxu0
        %v609 = vadd.f32 0.0, %v608
        %v610 = vpop.f32.mrb[0].mxu0
        %v611 = vadd.f32 0.0, %v610
        %612 = vdwg.mxu0
        %v613 = vmax.f32 %v422, %v424
        %v614 = vmax.f32 %v613, %v535
        %v615 = vmax.f32 %v614, %v537
        %616 = vmax.xlane.f32.xlu0 %v615
        %v617 = vpop.xlane.xlu0 %616
        %v618 = vmax.f32 %v426, %v428
        %v619 = vmax.f32 %v618, %v539
        %v620 = vmax.f32 %v619, %v541
        %621 = vmax.xlane.f32.xlu0 %v620
        %v622 = vpop.xlane.xlu0 %621
        %v623 = vmax.f32 %v432, %v434
        %v624 = vmax.f32 %v623, %v545
        %v625 = vmax.f32 %v624, %v547
        %626 = vmax.xlane.f32.xlu0 %v625
        %v627 = vpop.xlane.xlu0 %626
        %v628 = vmax.f32 %v436, %v438
        %v629 = vmax.f32 %v628, %v549
        %v630 = vmax.f32 %v629, %v551
        %631 = vmax.xlane.f32.xlu0 %v630
        %v632 = vpop.xlane.xlu0 %631
        %v633 = vmax.f32 %v442, %v444
        %v634 = vmax.f32 %v633, %v555
        %v635 = vmax.f32 %v634, %v557
        %636 = vmax.xlane.f32.xlu0 %v635
        %v637 = vpop.xlane.xlu0 %636
        %v638 = vmax.f32 %v446, %v448
        %v639 = vmax.f32 %v638, %v559
        %v640 = vmax.f32 %v639, %v561
        %641 = vmax.xlane.f32.xlu0 %v640
        %v642 = vpop.xlane.xlu0 %641
        %v643 = vmax.f32 %v452, %v454
        %v644 = vmax.f32 %v643, %v565
        %v645 = vmax.f32 %v644, %v567
        %646 = vmax.xlane.f32.xlu0 %v645
        %v647 = vpop.xlane.xlu0 %646
        %v648 = vmax.f32 %v456, %v458
        %v649 = vmax.f32 %v648, %v569
        %v650 = vmax.f32 %v649, %v571
        %651 = vmax.xlane.f32.xlu0 %v650
        %v652 = vpop.xlane.xlu0 %651
        %v653 = vmax.f32 %v462, %v464
        %v654 = vmax.f32 %v653, %v575
        %v655 = vmax.f32 %v654, %v577
        %656 = vmax.xlane.f32.xlu0 %v655
        %v657 = vpop.xlane.xlu0 %656
        %v658 = vmax.f32 %v466, %v468
        %v659 = vmax.f32 %v658, %v579
        %v660 = vmax.f32 %v659, %v581
        %661 = vmax.xlane.f32.xlu0 %v660
        %v662 = vpop.xlane.xlu0 %661
        %v663 = vmax.f32 %v472, %v474
        %v664 = vmax.f32 %v663, %v585
        %v665 = vmax.f32 %v664, %v587
        %666 = vmax.xlane.f32.xlu0 %v665
        %v667 = vpop.xlane.xlu0 %666
        %v668 = vmax.f32 %v476, %v478
        %v669 = vmax.f32 %v668, %v589
        %v670 = vmax.f32 %v669, %v591
        %671 = vmax.xlane.f32.xlu0 %v670
        %v672 = vpop.xlane.xlu0 %671
        %v673 = vmax.f32 %v482, %v484
        %v674 = vmax.f32 %v673, %v595
        %v675 = vmax.f32 %v674, %v597
        %676 = vmax.xlane.f32.xlu0 %v675
        %v677 = vpop.xlane.xlu0 %676
        %v678 = vmax.f32 %v486, %v488
        %v679 = vmax.f32 %v678, %v599
        %v680 = vmax.f32 %v679, %v601
        %681 = vmax.xlane.f32.xlu0 %v680
        %v682 = vpop.xlane.xlu0 %681
        %v683 = vmax.f32 %v492, %v494
        %v684 = vmax.f32 %v683, %v605
        %v685 = vmax.f32 %v684, %v607
        %686 = vmax.xlane.f32.xlu0 %v685
        %v687 = vpop.xlane.xlu0 %686
        %v688 = vmax.f32 %v496, %v498
        %v689 = vmax.f32 %v688, %v609
        %v690 = vmax.f32 %v689, %v611
        %691 = vmax.xlane.f32.xlu0 %v690
        %v692 = vpop.xlane.xlu0 %691
        %v693 = vsub.f32 %v422, %v617
        %v694 = vsub.f32 %v424, %v617
        %v695 = vsub.f32 %v535, %v617
        %v696 = vsub.f32 %v537, %v617
        %v697 = vsub.f32 %v426, %v622
        %v698 = vsub.f32 %v428, %v622
        %v699 = vsub.f32 %v539, %v622
        %v700 = vsub.f32 %v541, %v622
        %v701 = vsub.f32 %v432, %v627
        %v702 = vsub.f32 %v434, %v627
        %v703 = vsub.f32 %v545, %v627
        %v704 = vsub.f32 %v547, %v627
        %v705 = vsub.f32 %v436, %v632
        %v706 = vsub.f32 %v438, %v632
        %v707 = vsub.f32 %v549, %v632
        %v708 = vsub.f32 %v551, %v632
        %v709 = vsub.f32 %v442, %v637
        %v710 = vsub.f32 %v444, %v637
        %v711 = vsub.f32 %v555, %v637
        %v712 = vsub.f32 %v557, %v637
        %v713 = vsub.f32 %v446, %v642
        %v714 = vsub.f32 %v448, %v642
        %v715 = vsub.f32 %v559, %v642
        %v716 = vsub.f32 %v561, %v642
        %v717 = vsub.f32 %v452, %v647
        %v718 = vsub.f32 %v454, %v647
        %v719 = vsub.f32 %v565, %v647
        %v720 = vsub.f32 %v567, %v647
        %v721 = vsub.f32 %v456, %v652
        %v722 = vsub.f32 %v458, %v652
        %v723 = vsub.f32 %v569, %v652
        %v724 = vsub.f32 %v571, %v652
        %v725 = vsub.f32 %v462, %v657
        %v726 = vsub.f32 %v464, %v657
        %v727 = vsub.f32 %v575, %v657
        %v728 = vsub.f32 %v577, %v657
        %v729 = vsub.f32 %v466, %v662
        %v730 = vsub.f32 %v468, %v662
        %v731 = vsub.f32 %v579, %v662
        %v732 = vsub.f32 %v581, %v662
        %v733 = vsub.f32 %v472, %v667
        %v734 = vsub.f32 %v474, %v667
        %v735 = vsub.f32 %v585, %v667
        %v736 = vsub.f32 %v587, %v667
        %v737 = vsub.f32 %v476, %v672
        %v738 = vsub.f32 %v478, %v672
        %v739 = vsub.f32 %v589, %v672
        %v740 = vsub.f32 %v591, %v672
        %v741 = vsub.f32 %v482, %v677
        %v742 = vsub.f32 %v484, %v677
        %v743 = vsub.f32 %v595, %v677
        %v744 = vsub.f32 %v597, %v677
        %v745 = vsub.f32 %v486, %v682
        %v746 = vsub.f32 %v488, %v682
        %v747 = vsub.f32 %v599, %v682
        %v748 = vsub.f32 %v601, %v682
        %v749 = vsub.f32 %v492, %v687
        %v750 = vsub.f32 %v494, %v687
        %v751 = vsub.f32 %v605, %v687
        %v752 = vsub.f32 %v607, %v687
        %v753 = vsub.f32 %v496, %v692
        %v754 = vsub.f32 %v498, %v692
        %v755 = vsub.f32 %v609, %v692
        %v756 = vsub.f32 %v611, %v692
        %v757 = vpack.c.bf16 %v697, %v693
        %v758 = vpack.c.bf16 %v698, %v694
        %v759 = vpack.c.bf16 %v699, %v695
        %v760 = vpack.c.bf16 %v700, %v696
        %v761 = vpack.c.bf16 %v705, %v701
        %v762 = vpack.c.bf16 %v706, %v702
        %v763 = vpack.c.bf16 %v707, %v703
        %v764 = vpack.c.bf16 %v708, %v704
        %v765 = vpack.c.bf16 %v713, %v709
        %v766 = vpack.c.bf16 %v714, %v710
        %v767 = vpack.c.bf16 %v715, %v711
        %v768 = vpack.c.bf16 %v716, %v712
        %v769 = vpack.c.bf16 %v721, %v717
        %v770 = vpack.c.bf16 %v722, %v718
        %v771 = vpack.c.bf16 %v723, %v719
        %v772 = vpack.c.bf16 %v724, %v720
        %v773 = vpack.c.bf16 %v729, %v725
        %v774 = vpack.c.bf16 %v730, %v726
        %v775 = vpack.c.bf16 %v731, %v727
        %v776 = vpack.c.bf16 %v732, %v728
        %v777 = vpack.c.bf16 %v737, %v733
        %v778 = vpack.c.bf16 %v738, %v734
        %v779 = vpack.c.bf16 %v739, %v735
        %v780 = vpack.c.bf16 %v740, %v736
        %v781 = vpack.c.bf16 %v745, %v741
        %v782 = vpack.c.bf16 %v746, %v742
        %v783 = vpack.c.bf16 %v747, %v743
        %v784 = vpack.c.bf16 %v748, %v744
        %v785 = vpack.c.bf16 %v753, %v749
        %v786 = vpack.c.bf16 %v754, %v750
        %v787 = vpack.c.bf16 %v755, %v751
        %v788 = vpack.c.bf16 %v756, %v752
        %v790 = vmul.bf16 %v757, 1069105081
        %v791 = vpow.bf16.pop %v790
        %v793 = vmul.bf16 %v758, 1069105081
        %v794 = vpow.bf16.pop %v793
        %v796 = vmul.bf16 %v759, 1069105081
        %v797 = vpow.bf16.pop %v796
        %v799 = vmul.bf16 %v760, 1069105081
        %v800 = vpow.bf16.pop %v799
        %v802 = vmul.bf16 %v761, 1069105081
        %v803 = vpow.bf16.pop %v802
        %v805 = vmul.bf16 %v762, 1069105081
        %v806 = vpow.bf16.pop %v805
        %v808 = vmul.bf16 %v763, 1069105081
        %v809 = vpow.bf16.pop %v808
        %v811 = vmul.bf16 %v764, 1069105081
        %v812 = vpow.bf16.pop %v811
        %v814 = vmul.bf16 %v765, 1069105081
        %v815 = vpow.bf16.pop %v814
        %v817 = vmul.bf16 %v766, 1069105081
        %v818 = vpow.bf16.pop %v817
        %v820 = vmul.bf16 %v767, 1069105081
        %v821 = vpow.bf16.pop %v820
        %v823 = vmul.bf16 %v768, 1069105081
        %v824 = vpow.bf16.pop %v823
        %v826 = vmul.bf16 %v769, 1069105081
        %v827 = vpow.bf16.pop %v826
        %v829 = vmul.bf16 %v770, 1069105081
        %v830 = vpow.bf16.pop %v829
        %v832 = vmul.bf16 %v771, 1069105081
        %v833 = vpow.bf16.pop %v832
        %v835 = vmul.bf16 %v772, 1069105081
        %v836 = vpow.bf16.pop %v835
        %v838 = vmul.bf16 %v773, 1069105081
        %v839 = vpow.bf16.pop %v838
        %v841 = vmul.bf16 %v774, 1069105081
        %v842 = vpow.bf16.pop %v841
        %v844 = vmul.bf16 %v775, 1069105081
        %v845 = vpow.bf16.pop %v844
        %v847 = vmul.bf16 %v776, 1069105081
        %v848 = vpow.bf16.pop %v847
        %v850 = vmul.bf16 %v777, 1069105081
        %v851 = vpow.bf16.pop %v850
        %v853 = vmul.bf16 %v778, 1069105081
        %v854 = vpow.bf16.pop %v853
        %v856 = vmul.bf16 %v779, 1069105081
        %v857 = vpow.bf16.pop %v856
        %v859 = vmul.bf16 %v780, 1069105081
        %v860 = vpow.bf16.pop %v859
        %v862 = vmul.bf16 %v781, 1069105081
        %v863 = vpow.bf16.pop %v862
        %v865 = vmul.bf16 %v782, 1069105081
        %v866 = vpow.bf16.pop %v865
        %v868 = vmul.bf16 %v783, 1069105081
        %v869 = vpow.bf16.pop %v868
        %v871 = vmul.bf16 %v784, 1069105081
        %v872 = vpow.bf16.pop %v871
        %v874 = vmul.bf16 %v785, 1069105081
        %v875 = vpow.bf16.pop %v874
        %v877 = vmul.bf16 %v786, 1069105081
        %v878 = vpow.bf16.pop %v877
        %v880 = vmul.bf16 %v787, 1069105081
        %v881 = vpow.bf16.pop %v880
        %v883 = vmul.bf16 %v788, 1069105081
        %v884 = vpow.bf16.pop %v883
        %885 = vmatprep.subr.bf16.mxu0 %v794
        %886 = vmatpush1.bf16.xpose.msra.mxu0 %v791
        %887 = vmatprep.subr.bf16.mxu0 %v806
        %888 = vmatpush1.bf16.xpose.msra.mxu0 %v803
        %889 = vmatprep.subr.bf16.mxu0 %v818
        %890 = vmatpush1.bf16.xpose.msra.mxu0 %v815
        %891 = vmatprep.subr.bf16.mxu0 %v830
        %892 = vmatpush1.bf16.xpose.msra.mxu0 %v827
        %893 = vmatprep.subr.bf16.mxu0 %v842
        %894 = vmatpush1.bf16.xpose.msra.mxu0 %v839
        %895 = vmatprep.subr.bf16.mxu0 %v854
        %896 = vmatpush1.bf16.xpose.msra.mxu0 %v851
        %897 = vmatprep.subr.bf16.mxu0 %v866
        %898 = vmatpush1.bf16.xpose.msra.mxu0 %v863
        %899 = vmatprep.subr.bf16.mxu0 %v878
        %900 = vmatpush1.bf16.xpose.msra.mxu0 %v875
        %901 = vmatprep.subr.bf16.mxu0 0
        %902 = vmatpush1.bf16.xpose.msra.mxu0 0
        %903 = vmatprep.subr.bf16.mxu0 0
        %904 = vmatpush1.bf16.xpose.msra.mxu0 0
        %905 = vmatprep.subr.bf16.mxu0 0
        %906 = vmatpush1.bf16.xpose.msra.mxu0 0
        %907 = vmatprep.subr.bf16.mxu0 0
        %908 = vmatpush1.bf16.xpose.msra.mxu0 0
        %909 = vmatprep.subr.bf16.mxu0 0
        %910 = vmatpush1.bf16.xpose.msra.mxu0 0
        %911 = vmatprep.subr.bf16.mxu0 0
        %912 = vmatpush1.bf16.xpose.msra.mxu0 0
        %913 = vmatprep.subr.bf16.mxu0 0
        %914 = vmatpush1.bf16.xpose.msra.mxu0 0
        %915 = vmatprep.subr.bf16.mxu0 0
        %916 = vmatpush1.bf16.xpose.msra.mxu0 0
        %917 = vmatprep.mubr.bf16.mxu0 1065369472
        %918 = vmatmul.mubr.bf16.gmra.mrb[0].mxu0 1065369472
        %v919 = vpop.f32.mrb[0].mxu0
        %v920 = vadd.f32 0.0, %v919
        %v921 = vpop.f32.mrb[0].mxu0
        %v922 = vpop.f32.mrb[0].mxu0
        %v923 = vpop.f32.mrb[0].mxu0
        %924 = vdwg.mxu0
        %925 = vmatprep.subr.bf16.mxu0 %v800
        %926 = vmatpush1.bf16.xpose.msra.mxu0 %v797
        %927 = vmatprep.subr.bf16.mxu0 %v812
        %928 = vmatpush1.bf16.xpose.msra.mxu0 %v809
        %929 = vmatprep.subr.bf16.mxu0 %v824
        %930 = vmatpush1.bf16.xpose.msra.mxu0 %v821
        %931 = vmatprep.subr.bf16.mxu0 %v836
        %932 = vmatpush1.bf16.xpose.msra.mxu0 %v833
        %933 = vmatprep.subr.bf16.mxu0 %v848
        %934 = vmatpush1.bf16.xpose.msra.mxu0 %v845
        %935 = vmatprep.subr.bf16.mxu0 %v860
        %936 = vmatpush1.bf16.xpose.msra.mxu0 %v857
        %937 = vmatprep.subr.bf16.mxu0 %v872
        %938 = vmatpush1.bf16.xpose.msra.mxu0 %v869
        %939 = vmatprep.subr.bf16.mxu0 %v884
        %940 = vmatpush1.bf16.xpose.msra.mxu0 %v881
        %941 = vmatprep.subr.bf16.mxu0 0
        %942 = vmatpush1.bf16.xpose.msra.mxu0 0
        %943 = vmatprep.subr.bf16.mxu0 0
        %944 = vmatpush1.bf16.xpose.msra.mxu0 0
        %945 = vmatprep.subr.bf16.mxu0 0
        %946 = vmatpush1.bf16.xpose.msra.mxu0 0
        %947 = vmatprep.subr.bf16.mxu0 0
        %948 = vmatpush1.bf16.xpose.msra.mxu0 0
        %949 = vmatprep.subr.bf16.mxu0 0
        %950 = vmatpush1.bf16.xpose.msra.mxu0 0
        %951 = vmatprep.subr.bf16.mxu0 0
        %952 = vmatpush1.bf16.xpose.msra.mxu0 0
        %953 = vmatprep.subr.bf16.mxu0 0
        %954 = vmatpush1.bf16.xpose.msra.mxu0 0
        %955 = vmatprep.subr.bf16.mxu0 0
        %956 = vmatpush1.bf16.xpose.msra.mxu0 0
        %957 = vmatprep.mubr.bf16.mxu0 1065369472
        %958 = vmatmul.mubr.bf16.gmra.mrb[0].mxu0 1065369472
        %v959 = vpop.f32.mrb[0].mxu0
        %v960 = vadd.f32 %v920, %v959
        %v961 = vpop.f32.mrb[0].mxu0
        %v962 = vpop.f32.mrb[0].mxu0
        %v963 = vpop.f32.mrb[0].mxu0
        %964 = vdwg.mxu0
        %v965 = vrcp.pop %v960
        %s966 = smul.addr %s300, 4
        %s967 = scalar_lea.vmem %s234, %s966 [#allocation5]
        %v968 = vld [vmem:[%s967] sm:$0xf]
        %v969 = vld [vmem:[%s967 + $0x10] sm:$0xf]
        %v970 = vunpack.c.l.bf16 %v968
        %v971 = vunpack.c.l.bf16 %v969
        %v972 = vlaneseq
        %v973 = vshrl.u32 %v972, 7
        %v974 = vsub.s32 0, %v973
        %v975 = vrot.slane %v965, %v974
        %v976 = vmul.f32 %v970, %v975
        %v977 = vmul.f32 %v971, %v975
        %v978 = vpack.c.bf16 %v977, %v976
        %v979 = vld [vmem:[%s275] sm:$0xff]
        %v980 = vld [vmem:[%s275 + $0x8] sm:$0xff]
        %v981 = vld [vmem:[%s275 + $0x10] sm:$0xff]
        %v982 = vld [vmem:[%s275 + $0x18] sm:$0xff]
        %v983 = vld [vmem:[%s275 + $0x20] sm:$0xff]
        %v984 = vld [vmem:[%s275 + $0x28] sm:$0xff]
        %v985 = vld [vmem:[%s275 + $0x30] sm:$0xff]
        %v986 = vld [vmem:[%s275 + $0x38] sm:$0xff]
        %987 = vmatprep.subr.bf16.mxu0 %v794
        %988 = vmatpush1.bf16.msra.mxu0 %v791
        %989 = vmatprep.subr.bf16.mxu0 %v806
        %990 = vmatpush1.bf16.msra.mxu0 %v803
        %991 = vmatprep.subr.bf16.mxu0 %v818
        %992 = vmatpush1.bf16.msra.mxu0 %v815
        %993 = vmatprep.subr.bf16.mxu0 %v830
        %994 = vmatpush1.bf16.msra.mxu0 %v827
        %995 = vmatprep.subr.bf16.mxu0 %v842
        %996 = vmatpush1.bf16.msra.mxu0 %v839
        %997 = vmatprep.subr.bf16.mxu0 %v854
        %998 = vmatpush1.bf16.msra.mxu0 %v851
        %999 = vmatprep.subr.bf16.mxu0 %v866
        %1000 = vmatpush1.bf16.msra.mxu0 %v863
        %1001 = vmatprep.subr.bf16.mxu0 %v878
        %1002 = vmatpush1.bf16.msra.mxu0 %v875
        %1003 = vmatprep.subr.bf16.mxu0 0
        %1004 = vmatpush1.bf16.msra.mxu0 0
        %1005 = vmatprep.subr.bf16.mxu0 0
        %1006 = vmatpush1.bf16.msra.mxu0 0
        %1007 = vmatprep.subr.bf16.mxu0 0
        %1008 = vmatpush1.bf16.msra.mxu0 0
        %1009 = vmatprep.subr.bf16.mxu0 0
        %1010 = vmatpush1.bf16.msra.mxu0 0
        %1011 = vmatprep.subr.bf16.mxu0 0
        %1012 = vmatpush1.bf16.msra.mxu0 0
        %1013 = vmatprep.subr.bf16.mxu0 0
        %1014 = vmatpush1.bf16.msra.mxu0 0
        %1015 = vmatprep.subr.bf16.mxu0 0
        %1016 = vmatpush1.bf16.msra.mxu0 0
        %1017 = vmatprep.subr.bf16.mxu0 0
        %1018 = vmatpush1.bf16.msra.mxu0 0
        %1019 = vmatprep.mubr.bf16.mxu0 0
        %1020 = vmatmul.mubr.bf16.gmra.mrb[0].mxu0 %v978
        %v1021 = vpop.f32.mrb[0].mxu0
        %v1022 = vadd.f32 0.0, %v1021
        %v1023 = vpop.f32.mrb[0].mxu0
        %v1024 = vadd.f32 0.0, %v1023
        %v1025 = vpop.f32.mrb[0].mxu0
        %v1026 = vadd.f32 0.0, %v1025
        %v1027 = vpop.f32.mrb[0].mxu0
        %v1028 = vadd.f32 0.0, %v1027
        %1029 = vdwg.mxu0
        %1030 = vmatprep.subr.bf16.mxu0 %v800
        %1031 = vmatpush1.bf16.msra.mxu0 %v797
        %1032 = vmatprep.subr.bf16.mxu0 %v812
        %1033 = vmatpush1.bf16.msra.mxu0 %v809
        %1034 = vmatprep.subr.bf16.mxu0 %v824
        %1035 = vmatpush1.bf16.msra.mxu0 %v821
        %1036 = vmatprep.subr.bf16.mxu0 %v836
        %1037 = vmatpush1.bf16.msra.mxu0 %v833
        %1038 = vmatprep.subr.bf16.mxu0 %v848
        %1039 = vmatpush1.bf16.msra.mxu0 %v845
        %1040 = vmatprep.subr.bf16.mxu0 %v860
        %1041 = vmatpush1.bf16.msra.mxu0 %v857
        %1042 = vmatprep.subr.bf16.mxu0 %v872
        %1043 = vmatpush1.bf16.msra.mxu0 %v869
        %1044 = vmatprep.subr.bf16.mxu0 %v884
        %1045 = vmatpush1.bf16.msra.mxu0 %v881
        %1046 = vmatprep.subr.bf16.mxu0 0
        %1047 = vmatpush1.bf16.msra.mxu0 0
        %1048 = vmatprep.subr.bf16.mxu0 0
        %1049 = vmatpush1.bf16.msra.mxu0 0
        %1050 = vmatprep.subr.bf16.mxu0 0
        %1051 = vmatpush1.bf16.msra.mxu0 0
        %1052 = vmatprep.subr.bf16.mxu0 0
        %1053 = vmatpush1.bf16.msra.mxu0 0
        %1054 = vmatprep.subr.bf16.mxu0 0
        %1055 = vmatpush1.bf16.msra.mxu0 0
        %1056 = vmatprep.subr.bf16.mxu0 0
        %1057 = vmatpush1.bf16.msra.mxu0 0
        %1058 = vmatprep.subr.bf16.mxu0 0
        %1059 = vmatpush1.bf16.msra.mxu0 0
        %1060 = vmatprep.subr.bf16.mxu0 0
        %1061 = vmatpush1.bf16.msra.mxu0 0
        %1062 = vmatprep.mubr.bf16.mxu0 0
        %1063 = vmatmul.mubr.bf16.gmra.mrb[0].mxu0 %v978
        %v1064 = vpop.f32.mrb[0].mxu0
        %v1065 = vadd.f32 0.0, %v1064
        %v1066 = vpop.f32.mrb[0].mxu0
        %v1067 = vadd.f32 0.0, %v1066
        %v1068 = vpop.f32.mrb[0].mxu0
        %v1069 = vadd.f32 0.0, %v1068
        %v1070 = vpop.f32.mrb[0].mxu0
        %v1071 = vadd.f32 0.0, %v1070
        %1072 = vdwg.mxu0
        %v1073 = vadd.f32 %v979, %v1022
        %v1074 = vadd.f32 %v980, %v1024
        %v1075 = vadd.f32 %v981, %v1065
        %v1076 = vadd.f32 %v982, %v1067
        %v1077 = vadd.f32 %v983, %v1026
        %v1078 = vadd.f32 %v984, %v1028
        %v1079 = vadd.f32 %v985, %v1069
        %v1080 = vadd.f32 %v986, %v1071
        %1081 = vst [vmem:[%s275] sm:$0xff] %v1073
        %1082 = vst [vmem:[%s275 + $0x8] sm:$0xff] %v1074
        %1083 = vst [vmem:[%s275 + $0x10] sm:$0xff] %v1075
        %1084 = vst [vmem:[%s275 + $0x18] sm:$0xff] %v1076
        %1085 = vst [vmem:[%s275 + $0x20] sm:$0xff] %v1077
        %1086 = vst [vmem:[%s275 + $0x28] sm:$0xff] %v1078
        %1087 = vst [vmem:[%s275 + $0x30] sm:$0xff] %v1079
        %1088 = vst [vmem:[%s275 + $0x38] sm:$0xff] %v1080
        %s1089 = sand.u32 %s121, 1
        %s1090 = scalar_lea.sflag [#allocation4], %s1089
        %s1091 = sand.u32 %s121, 1
        %s1092 = smul.addr %s1091, 64
        %s1093 = scalar_lea.vmem [#allocation8], %s1092
        // Predicated region
        $region49: #{tpu_custom_call.1} parent=31 // pred_check
          %p1094 = pneg %p131
        $region50: #{tpu_custom_call.1} parent=31 // pred_check_branch
          %1096 = sbr.rel (%p1094) target = $region52
        $region51: #{tpu_custom_call.1} parent=31 // pred_region
          %s1098 = ssub.s32 1024, 1024
          %1099 = vsyncadd %s1090, %s1098
          %s1100 = smul.addr %s27, 8
          %s1101 = smul.addr %s1100, 128
          %s1102 = scalar_lea.hbm %s3, %s1101
          %s1103 = sshll.u32 %s1093, 4
          %s1104 = int_to_ptr.vmem [resolvable:$true] %s1103
          %1109 = dma.vmem_to_hbm [thread:$0]  %s1104, 1024, %s1102, %s1090, 512, 512, 32
        $region52: #{tpu_custom_call.1} parent=31 // pred_fallthru
          _
      $region32: #{tpu_custom_call.1} parent=5 // pred_fallthru
        _
      %p1110 = scmp.le.s32.totalorder 2, %s18
      // Predicated region
      $region53: #{tpu_custom_call.1} parent=5 // pred_check
        %p1111 = pneg %p1110
      $region54: #{tpu_custom_call.1} parent=5 // pred_check_branch
        %1113 = sbr.rel (%p1111) target = $region56
      $region55: #{tpu_custom_call.1} parent=5 // pred_region
        %s1114 = ssub.s32 %s18, 2
        // Predicated region
        $region57: #{tpu_custom_call.1} parent=55 // pred_check
          %p1115 = pneg %p137
        $region58: #{tpu_custom_call.1} parent=55 // pred_check_branch
          %1117 = sbr.rel (%p1115) target = $region60
        $region59: #{tpu_custom_call.1} parent=55 // pred_region
          %s1118 = sand.u32 %s122, 1
          %s1119 = scalar_lea.sflag [#allocation4], %s1118
          %s1120 = sand.u32 %s122, 1
          %s1121 = smul.addr %s1120, 64
          %s1122 = scalar_lea.vmem [#allocation8], %s1121
          %1123 = dma.done %s1119, 1024
        $region60: #{tpu_custom_call.1} parent=55 // pred_fallthru
          _
      $region56: #{tpu_custom_call.1} parent=5 // pred_fallthru
        _
    $region6: #{tpu_custom_call.1} parent=1 // loop_footer
      %s22 = sadd.s32 1, %s18
    $region7: #{tpu_custom_call.1} parent=1 // loop_footer_branch
      %17 = sbr.rel target = $region3
    $region8: #{tpu_custom_call.1} parent=1 // loop_exit
      _
    %1124 = vsyncpa [#allocation3], 1
    %s1125 = scalar_lea.sflag [#allocation3], 1
    %1126 = vsyncpa %s1125, 1
    %1127 = vsyncpa [#allocation6], 1
    %s1128 = scalar_lea.sflag [#allocation6], 1
    %1129 = vsyncpa %s1128, 1
    %1130 = vsyncpa [#allocation4], 1
    %s1131 = scalar_lea.sflag [#allocation4], 1
    %1132 = vsyncpa %s1131, 1

</llo_original>
